<compile_context>
chip_gen: v7x
topology: tpu7x:2x2x1
jax: 0.10.0
libtpu: 0.0.40
codegen_flags: <defaults>
</compile_context>

<pallas_src>
import functools

import jax
import jax.numpy as jnp
from jax.experimental import pallas as pl
from jax.experimental.pallas import tpu as pltpu


def _ratio_loss_kernel(points_ref, bank_ref, idx_ref, sim_ref, loss_ref,
                       norm_sc, total_sc, pos_sc, *, inv_t, n_total, inv_b):
    j = pl.program_id(0)
    tn = sim_ref.shape[1]

    # Hoisted work: normalize points and zero the accumulators only on tile 0.
    @pl.when(j == 0)
    def _():
        x = points_ref[...].astype(jnp.float32)                          # (B, D)
        norm_sc[...] = x / jnp.sqrt(jnp.sum(x * x, axis=1, keepdims=True))
        total_sc[...] = jnp.zeros_like(total_sc)
        pos_sc[...] = jnp.zeros_like(pos_sc)

    # similarities for this bank tile: (B, D) @ (D, TN) -> (B, TN) on the MXU.
    # (Kept f32 to match the PyTorch reference bit-for-bit-ish; shipping the
    #  bank as bf16 would halve HBM traffic if looser tolerance is acceptable.)
    sim = jnp.dot(norm_sc[...], bank_ref[...].astype(jnp.float32),
                  preferred_element_type=jnp.float32)                    # (B, TN)
    sim_ref[...] = sim.astype(sim_ref.dtype)

    # Global column ids for this tile; mask out padded columns of the last tile.
    col = jax.lax.broadcasted_iota(jnp.int32, sim.shape, 1) + j * tn     # (B, TN)
    valid = col < n_total
    ps = jnp.where(valid, jnp.exp(sim * inv_t), 0.0)                     # (B, TN)

    idx = idx_ref[...]                                                   # (B, 1)
    pos_mask = col == idx                                                # (B, TN)

    total_sc[...] += jnp.sum(ps, axis=1, keepdims=True)                  # (B, 1)
    pos_sc[...] += jnp.sum(jnp.where(pos_mask, ps, 0.0), axis=1, keepdims=True)

    # Finalize only after every bank tile has been accumulated.
    @pl.when(j == pl.num_programs(0) - 1)
    def _():
        positive = pos_sc[...]                                           # (B, 1)
        negative = total_sc[...] - positive                              # (B, 1)
        ratio = positive / negative + 1e-07
        loss_ref[...] = -jnp.sum(jnp.log(ratio), axis=0, keepdims=True) * inv_b


def ratio_loss(points, point_indices, memory_bank, t, *, tn=512):
    """points: (B, D) f32, point_indices: (B,) int, memory_bank: (N, D) f32."""
    B, D = points.shape
    N, _ = memory_bank.shape

    # Tile width over the bank axis. A single full-extent tile is always legal;
    # otherwise the lane dimension of the block must be a multiple of 128.
    if N <= tn:
        tn_eff = N
    else:
        assert tn % 128 == 0, "bank tile width must be a multiple of 128"
        tn_eff = tn
    grid = (int(pl.cdiv(N, tn_eff)),)

    # Layout plumbing outside the kernel: contraction dim leading on the RHS.
    bank_t = memory_bank.T.astype(jnp.float32)            # (D, N)
    idx2d = point_indices.astype(jnp.int32).reshape(B, 1)

    kernel = functools.partial(
        _ratio_loss_kernel,
        inv_t=1.0 / float(t),
        n_total=N,
        inv_b=1.0 / float(B),
    )

    sim, loss = pl.pallas_call(
        kernel,
        out_shape=(
            jax.ShapeDtypeStruct((B, N), jnp.float32),     # similarities
            jax.ShapeDtypeStruct((1, 1), jnp.float32),     # loss scalar
        ),
        grid_spec=pltpu.PrefetchScalarGridSpec(
            num_scalar_prefetch=0,
            grid=grid,
            in_specs=[
                pl.BlockSpec((B, D), lambda j: (0, 0)),        # points (resident)
                pl.BlockSpec((D, tn_eff), lambda j: (0, j)),   # bank^T (streamed)
                pl.BlockSpec((B, 1), lambda j: (0, 0)),        # indices (resident)
            ],
            out_specs=(
                pl.BlockSpec((B, tn_eff), lambda j: (0, j)),   # sim tile
                pl.BlockSpec((1, 1), lambda j: (0, 0)),        # loss (resident)
            ),
            scratch_shapes=[
                pltpu.VMEM((B, D), jnp.float32),   # normalized points
                pltpu.VMEM((B, 1), jnp.float32),   # total exp-sum accumulator
                pltpu.VMEM((B, 1), jnp.float32),   # positive exp accumulator
            ],
        ),
        compiler_params=pltpu.CompilerParams(
            dimension_semantics=("arbitrary",),    # reduction axis
        ),
        cost_estimate=pl.CostEstimate(
            flops=2 * B * N * D,
            transcendentals=B * N,
            bytes_accessed=N * D * 4 + B * N * 4 + B * D * 4 + B * 4,
        ),
    )(points, bank_t, idx2d)

    return loss[0, 0], sim


def _reference(points, point_indices, memory_bank, t):
    norm = points / jnp.sqrt(jnp.sum(points ** 2, axis=1, keepdims=True))
    sim = norm @ memory_bank.T
    ps = jnp.exp(sim / t)
    pos = ps[jnp.arange(points.shape[0]), point_indices]
    neg = ps.sum(axis=1) - pos
    return -jnp.mean(jnp.log(pos / neg + 1e-07)), sim


if __name__ == "__main__":
    t = 0.07
    key = jax.random.PRNGKey(0)

    # Case 1: N a multiple of the tile width; Case 2: padded last tile.
    for (B, D, N, tn) in [(8, 32, 384, 128), (8, 32, 320, 128)]:
        k1, k2, k3, key = jax.random.split(key, 4)
        points = jax.random.normal(k1, (B, D), dtype=jnp.float32)
        memory_bank = jax.random.normal(k2, (N, D), dtype=jnp.float32)
        memory_bank = memory_bank / jnp.sqrt(
            jnp.sum(memory_bank ** 2, axis=1, keepdims=True))
        point_indices = jax.random.randint(k3, (B,), 0, N, dtype=jnp.int32)

        loss, sim = ratio_loss(points, point_indices, memory_bank, t, tn=tn)
        loss = jax.block_until_ready(loss)
        sim = jax.block_until_ready(sim)

        ref_loss, ref_sim = _reference(points, point_indices, memory_bank, t)
        assert jnp.allclose(sim, ref_sim, atol=1e-5, rtol=1e-5), "similarities mismatch"
        assert jnp.allclose(loss, ref_loss, atol=1e-4, rtol=1e-5), "loss mismatch"

    print("KERNEL_OK")
</pallas_src>

<mosaic_0001>
module attributes {stable_mosaic.version = 11 : i64} {
  func.func @_ratio_loss_kernel(%arg0: i32, %arg1: memref<8x32xf32, #tpu.memory_space<vmem>>, %arg2: memref<32x128xf32, #tpu.memory_space<vmem>>, %arg3: memref<8x1xi32, #tpu.memory_space<vmem>>, %arg4: memref<8x128xf32, #tpu.memory_space<vmem>>, %arg5: memref<1x1xf32, #tpu.memory_space<vmem>>, %arg6: memref<8x32xf32, #tpu.memory_space<vmem>>, %arg7: memref<8x1xf32, #tpu.memory_space<vmem>>, %arg8: memref<8x1xf32, #tpu.memory_space<vmem>>) attributes {dimension_semantics = [#tpu.dimension_semantics<arbitrary>], iteration_bounds = array<i64: 3>, scalar_prefetch = 0 : i64, scratch_operands = 3 : i64, tpu.core_type = #tpu.core_type<tc>, window_params = [{pipeline_mode = #tpu.pipeline_mode<synchronous>, transform_indices = @transform_0, window_bounds = array<i64: 8, 32>}, {transform_indices = @transform_1, window_bounds = array<i64: 32, 128>}, {pipeline_mode = #tpu.pipeline_mode<synchronous>, transform_indices = @transform_2, window_bounds = array<i64: 8, 1>}, {transform_indices = @transform_3, window_bounds = array<i64: 8, 128>}, {pipeline_mode = #tpu.pipeline_mode<synchronous>, transform_indices = @transform_4, window_bounds = array<i64: 1, 1>}]} {
    %c0_i32 = arith.constant 0 : i32
    %0 = arith.cmpi eq, %arg0, %c0_i32 : i32
    %1 = arith.extui %0 : i1 to i32
    %c0_i32_0 = arith.constant 0 : i32
    %2 = arith.cmpi ne, %1, %c0_i32_0 : i32
    scf.if %2 {
      %c0_22 = arith.constant 0 : index
      %c0_23 = arith.constant 0 : index
      %36 = vector.load %arg1[%c0_22, %c0_23] : memref<8x32xf32, #tpu.memory_space<vmem>>, vector<8x32xf32>
      %37 = arith.mulf %36, %36 : vector<8x32xf32>
      %cst_24 = arith.constant dense<0.000000e+00> : vector<8xf32>
      %38 = vector.multi_reduction <add>, %37, %cst_24 [1] : vector<8x32xf32> to vector<8xf32>
      %39 = vector.shape_cast %38 : vector<8xf32> to vector<8x1xf32>
      %40 = math.sqrt %39 : vector<8x1xf32>
      %41 = vector.broadcast %40 : vector<8x1xf32> to vector<8x32xf32>
      %42 = arith.divf %36, %41 : vector<8x32xf32>
      %c0_25 = arith.constant 0 : index
      %c0_26 = arith.constant 0 : index
      %43 = vector.load %arg6[%c0_25, %c0_26] : memref<8x32xf32, #tpu.memory_space<vmem>>, vector<8x32xf32>
      tpu.vector_store %arg6[%c0_25, %c0_26], %42 {strides = array<i32>} : memref<8x32xf32, #tpu.memory_space<vmem>>, vector<8x32xf32>,
      %cst_27 = arith.constant 0.000000e+00 : f32
      %44 = vector.broadcast %cst_27 : f32 to vector<8x1xf32>
      %c0_28 = arith.constant 0 : index
      %c0_29 = arith.constant 0 : index
      %45 = vector.load %arg7[%c0_28, %c0_29] : memref<8x1xf32, #tpu.memory_space<vmem>>, vector<8x1xf32>
      tpu.vector_store %arg7[%c0_28, %c0_29], %44 {strides = array<i32>} : memref<8x1xf32, #tpu.memory_space<vmem>>, vector<8x1xf32>,
      %cst_30 = arith.constant 0.000000e+00 : f32
      %46 = vector.broadcast %cst_30 : f32 to vector<8x1xf32>
      %c0_31 = arith.constant 0 : index
      %c0_32 = arith.constant 0 : index
      %47 = vector.load %arg8[%c0_31, %c0_32] : memref<8x1xf32, #tpu.memory_space<vmem>>, vector<8x1xf32>
      tpu.vector_store %arg8[%c0_31, %c0_32], %46 {strides = array<i32>} : memref<8x1xf32, #tpu.memory_space<vmem>>, vector<8x1xf32>,
    } else {
    }
    %c0 = arith.constant 0 : index
    %c0_1 = arith.constant 0 : index
    %3 = vector.load %arg6[%c0, %c0_1] : memref<8x32xf32, #tpu.memory_space<vmem>>, vector<8x32xf32>
    %c0_2 = arith.constant 0 : index
    %c0_3 = arith.constant 0 : index
    %4 = vector.load %arg2[%c0_2, %c0_3] : memref<32x128xf32, #tpu.memory_space<vmem>>, vector<32x128xf32>
    %cst = arith.constant dense<0.000000e+00> : vector<8x128xf32>
    %5 = tpu.matmul %3, %4, %cst {dimension_numbers = #tpu.dot_dimension_numbers<[1], [0], [0], [1], [0, 0, 1, 1], [], []>} : vector<8x32xf32>, vector<32x128xf32>, vector<8x128xf32> -> vector<8x128xf32>
    %c0_4 = arith.constant 0 : index
    %c0_5 = arith.constant 0 : index
    %6 = vector.load %arg4[%c0_4, %c0_5] : memref<8x128xf32, #tpu.memory_space<vmem>>, vector<8x128xf32>
    tpu.vector_store %arg4[%c0_4, %c0_5], %5 {strides = array<i32>} : memref<8x128xf32, #tpu.memory_space<vmem>>, vector<8x128xf32>,
    %7 = tpu.iota {dimensions = array<i32: 1>} : vector<8x128xi32>
    %c128_i32 = arith.constant 128 : i32
    %8 = arith.muli %arg0, %c128_i32 : i32
    %9 = vector.broadcast %8 : i32 to vector<8x128xi32>
    %10 = arith.addi %7, %9 : vector<8x128xi32>
    %c384_i32 = arith.constant 384 : i32
    %11 = vector.broadcast %c384_i32 : i32 to vector<8x128xi32>
    %12 = arith.cmpi slt, %10, %11 : vector<8x128xi32>
    %cst_6 = arith.constant 14.2857141 : f32
    %13 = vector.broadcast %cst_6 : f32 to vector<8x128xf32>
    %14 = arith.mulf %5, %13 : vector<8x128xf32>
    %15 = math.exp %14 : vector<8x128xf32>
    %cst_7 = arith.constant 0.000000e+00 : f32
    %16 = vector.broadcast %cst_7 : f32 to vector<8x128xf32>
    %17 = arith.select %12, %15, %16 : vector<8x128xi1>, vector<8x128xf32>
    %c0_8 = arith.constant 0 : index
    %c0_9 = arith.constant 0 : index
    %18 = vector.load %arg3[%c0_8, %c0_9] : memref<8x1xi32, #tpu.memory_space<vmem>>, vector<8x1xi32>
    %19 = vector.broadcast %18 : vector<8x1xi32> to vector<8x128xi32>
    %20 = arith.cmpi eq, %10, %19 : vector<8x128xi32>
    %c0_10 = arith.constant 0 : index
    %c0_11 = arith.constant 0 : index
    %21 = vector.load %arg7[%c0_10, %c0_11] : memref<8x1xf32, #tpu.memory_space<vmem>>, vector<8x1xf32>
    %cst_12 = arith.constant dense<0.000000e+00> : vector<8xf32>
    %22 = vector.multi_reduction <add>, %17, %cst_12 [1] : vector<8x128xf32> to vector<8xf32>
    %23 = vector.shape_cast %22 : vector<8xf32> to vector<8x1xf32>
    %24 = arith.addf %21, %23 : vector<8x1xf32>
    %c0_13 = arith.constant 0 : index
    %c0_14 = arith.constant 0 : index
    %25 = vector.load %arg7[%c0_13, %c0_14] : memref<8x1xf32, #tpu.memory_space<vmem>>, vector<8x1xf32>
    tpu.vector_store %arg7[%c0_13, %c0_14], %24 {strides = array<i32>} : memref<8x1xf32, #tpu.memory_space<vmem>>, vector<8x1xf32>,
    %c0_15 = arith.constant 0 : index
    %c0_16 = arith.constant 0 : index
    %26 = vector.load %arg8[%c0_15, %c0_16] : memref<8x1xf32, #tpu.memory_space<vmem>>, vector<8x1xf32>
    %cst_17 = arith.constant 0.000000e+00 : f32
    %27 = vector.broadcast %cst_17 : f32 to vector<8x128xf32>
    %28 = arith.select %20, %17, %27 : vector<8x128xi1>, vector<8x128xf32>
    %cst_18 = arith.constant dense<0.000000e+00> : vector<8xf32>
    %29 = vector.multi_reduction <add>, %28, %cst_18 [1] : vector<8x128xf32> to vector<8xf32>
    %30 = vector.shape_cast %29 : vector<8xf32> to vector<8x1xf32>
    %31 = arith.addf %26, %30 : vector<8x1xf32>
    %c0_19 = arith.constant 0 : index
    %c0_20 = arith.constant 0 : index
    %32 = vector.load %arg8[%c0_19, %c0_20] : memref<8x1xf32, #tpu.memory_space<vmem>>, vector<8x1xf32>
    tpu.vector_store %arg8[%c0_19, %c0_20], %31 {strides = array<i32>} : memref<8x1xf32, #tpu.memory_space<vmem>>, vector<8x1xf32>,
    %c2_i32 = arith.constant 2 : i32
    %33 = arith.cmpi eq, %arg0, %c2_i32 : i32
    %34 = arith.extui %33 : i1 to i32
    %c0_i32_21 = arith.constant 0 : i32
    %35 = arith.cmpi ne, %34, %c0_i32_21 : i32
    scf.if %35 {
      %c0_22 = arith.constant 0 : index
      %c0_23 = arith.constant 0 : index
      %36 = vector.load %arg8[%c0_22, %c0_23] : memref<8x1xf32, #tpu.memory_space<vmem>>, vector<8x1xf32>
      %c0_24 = arith.constant 0 : index
      %c0_25 = arith.constant 0 : index
      %37 = vector.load %arg7[%c0_24, %c0_25] : memref<8x1xf32, #tpu.memory_space<vmem>>, vector<8x1xf32>
      %38 = arith.subf %37, %36 : vector<8x1xf32>
      %39 = arith.divf %36, %38 : vector<8x1xf32>
      %cst_26 = arith.constant 1.000000e-07 : f32
      %40 = vector.broadcast %cst_26 : f32 to vector<8x1xf32>
      %41 = arith.addf %39, %40 : vector<8x1xf32>
      %42 = math.log %41 : vector<8x1xf32>
      %cst_27 = arith.constant dense<0.000000e+00> : vector<1xf32>
      %43 = vector.multi_reduction <add>, %42, %cst_27 [0] : vector<8x1xf32> to vector<1xf32>
      %44 = vector.shape_cast %43 : vector<1xf32> to vector<1x1xf32>
      %cst_28 = arith.constant 0.000000e+00 : f32
      %45 = vector.broadcast %cst_28 : f32 to vector<1x1xf32>
      %46 = arith.subf %45, %44 : vector<1x1xf32>
      %cst_29 = arith.constant 1.250000e-01 : f32
      %47 = vector.broadcast %cst_29 : f32 to vector<1x1xf32>
      %48 = arith.mulf %46, %47 : vector<1x1xf32>
      %c0_30 = arith.constant 0 : index
      %c0_31 = arith.constant 0 : index
      %49 = vector.load %arg5[%c0_30, %c0_31] : memref<1x1xf32, #tpu.memory_space<vmem>>, vector<1x1xf32>
      tpu.vector_store %arg5[%c0_30, %c0_31], %48 {strides = array<i32>} : memref<1x1xf32, #tpu.memory_space<vmem>>, vector<1x1xf32>,
    } else {
    }
    return
  }
  func.func @transform_0(%arg0: i32) -> (i32, i32) {
    %c0_i32 = arith.constant 0 : i32
    %c0_i32_0 = arith.constant 0 : i32
    %c0_i32_1 = arith.constant 0 : i32
    return %c0_i32, %c0_i32_0 : i32, i32
  }
  func.func @transform_1(%arg0: i32) -> (i32, i32) {
    %c0_i32 = arith.constant 0 : i32
    %c0_i32_0 = arith.constant 0 : i32
    return %c0_i32, %arg0 : i32, i32
  }
  func.func @transform_2(%arg0: i32) -> (i32, i32) {
    %c0_i32 = arith.constant 0 : i32
    %c0_i32_0 = arith.constant 0 : i32
    %c0_i32_1 = arith.constant 0 : i32
    return %c0_i32, %c0_i32_0 : i32, i32
  }
  func.func @transform_3(%arg0: i32) -> (i32, i32) {
    %c0_i32 = arith.constant 0 : i32
    %c0_i32_0 = arith.constant 0 : i32
    return %c0_i32, %arg0 : i32, i32
  }
  func.func @transform_4(%arg0: i32) -> (i32, i32) {
    %c0_i32 = arith.constant 0 : i32
    %c0_i32_0 = arith.constant 0 : i32
    %c0_i32_1 = arith.constant 0 : i32
    return %c0_i32, %c0_i32_0 : i32, i32
  }
}

</mosaic_0001>

<llo_original>
// kernel: tpu_custom_call.1
$region0: #{tpu_custom_call.1}
  #allocation0 [shape = 'u32[]', space=smem, size = 0x4, offset = 0x4, fixed_abs, tag = 'smem constant byte address 0x4 - core index']
  #allocation1 [shape = 'u32[144,128]{1,0:T(1,128)}', space=vmem, size = 0x12000, scoped, tag = 'internal scratch']
  #allocation2 [shape = 'f32[8,32]{1,0:T(8,128)}', space=vmem, size = 0x1000, scoped, tag = 'scratch operand']
  #allocation3 [shape = 'f32[8,1]{1,0:T(8,128)}', space=vmem, size = 0x1000, scoped, tag = 'scratch operand']
  #allocation4 [shape = 'f32[8,1]{1,0:T(8,128)}', space=vmem, size = 0x1000, scoped, tag = 'scratch operand']
  %s0 = inlined_call_operand.vmem [shape: f32[8,32], index: 0, kind: input, shape index: {}]
  %s1 = inlined_call_operand.hbm [shape: f32[32,384], index: 1, kind: input, shape index: {}]
  %s2 = inlined_call_operand.vmem [shape: s32[8,1], index: 2, kind: input, shape index: {}]
  %s3 = inlined_call_operand.hbm [shape: f32[8,384], index: 3, kind: output, shape index: {0}]
  %s4 = inlined_call_operand.hbm [shape: f32[1,1], index: 4, kind: output, shape index: {1}]
  %5 = xla_tuple %s3, %s4
  %s6 = sld [smem:[#allocation0]]
  $region65: #{tpu_custom_call.1} parent=0
    _
  %s8 = ssub.s32 1, %s6
  %s9 = scalar_select 0, %s8, %s6
  $region1: #{tpu_custom_call.1} parent=0
    #allocation5 [shape = 'u8[32768]{0}', space=vmem, size = 0x8000, scoped, tag = 'input window, operand 1']
    #allocation6 [shape = 's32[2]{0}', space=sflag, size = 0x8, scoped, tag = 'scoped memory for tpu_custom_call.1']
    #allocation7 [shape = 's32[2]{0}', space=sflag, size = 0x8, scoped, tag = 'scoped memory for tpu_custom_call.1']
    #allocation8 [shape = 'u8[8192]{0}', space=vmem, size = 0x2000, scoped, tag = 'output window, operand 0']
    #allocation9 [shape = 'u8[512]{0}', space=vmem, size = 0x400, scoped, tag = 'output window, operand 1, single buffered']
    #allocation10 [shape = 's32[1]{0}', space=sflag, size = 0x4, scoped, tag = 'scoped memory for tpu_custom_call.1']
    %10 = vsyncpa [#allocation6], 0
    %s11 = scalar_lea.sflag [#allocation6], 1
    %12 = vsyncpa %s11, 0
    %13 = vsyncpa [#allocation7], 0
    %s14 = scalar_lea.sflag [#allocation7], 1
    %15 = vsyncpa %s14, 0
    %16 = vsyncpa [#allocation10], 0
    loop: start=0, step=1, limit=5
    $region2: #{tpu_custom_call.1} parent=1 // loop_pre_header
      _
    $region3: #{tpu_custom_call.1} parent=1 // loop_header
      %s18 = sphi 0, %s22
      %p19 = scmp.ge.s32.totalorder %s18, 5
      %s26 = sphi 0, %s26
      %s28 = sphi 0, %s26
      %s29 = sphi 0, %s28
      %s43 = sphi 0, %s29
      %s49 = sphi 0, %s51
      %s52 = sphi 0, %s49
      %s53 = sphi 0, %s52
      %s69 = sphi 0, %s53
      %s73 = sphi 0, %s73
      %s75 = sphi 0, %s73
      %s76 = sphi 0, %s75
      %s90 = sphi 0, %s76
      %s96 = sphi 0, %s98
      %s99 = sphi 0, %s96
      %s100 = sphi 0, %s99
      %s116 = sphi 0, %s100
      %s120 = sphi 0, %s120
      %s122 = sphi 0, %s120
      %s123 = sphi 0, %s122
      %s137 = sphi 0, %s123
    $region4: #{tpu_custom_call.1} parent=1 // loop_header_branch
      %21 = sbr.rel (%p19) target = $region8
    $region5: #{tpu_custom_call.1} parent=1 // loop_body
      %s23 = ssub.s32 %s18, 1
      %s24 = ssub.s32 %s18, 2
      %s25 = sadd.s32 %s18, 1
      %s27 = sadd.s32 %s26, 1
      %p30 = scmp.eq.s32.totalorder %s18, 2
      %p31 = scmp.ne.s32.totalorder %s26, %s28
      %p32 = scmp.eq.s32.totalorder %s18, 0
      %p33 = por %p31, %p32
      %p34 = scmp.ne.s32.totalorder %s26, %s28
      %p35 = scmp.eq.s32.totalorder %s23, 2
      %p36 = por %p34, %p35
      %p37 = scmp.ne.s32.totalorder %s28, %s29
      %p38 = scmp.eq.s32.totalorder %s23, 0
      %p39 = por %p37, %p38
      %p40 = scmp.ne.s32.totalorder %s28, %s29
      %p41 = scmp.eq.s32.totalorder %s24, 2
      %p42 = por %p40, %p41
      %p44 = scmp.ne.s32.totalorder %s29, %s43
      %p45 = scmp.eq.s32.totalorder %s24, 0
      %p46 = por %p44, %p45
      %s47 = ssub.s32 %s18, %s25
      %p48 = scmp.eq.s32.totalorder %s47, 0
      %s50 = sadd.s32 %s49, 1
      %s51 = scalar_select %p48, %s49, %s50
      %p54 = pneg %p48
      %p55 = scmp.eq.s32.totalorder %s18, 2
      %p56 = por %p54, %p55
      %p57 = scmp.ne.s32.totalorder %s49, %s52
      %p58 = scmp.eq.s32.totalorder %s18, 0
      %p59 = por %p57, %p58
      %p60 = scmp.ne.s32.totalorder %s49, %s52
      %p61 = scmp.eq.s32.totalorder %s23, 2
      %p62 = por %p60, %p61
      %p63 = scmp.ne.s32.totalorder %s52, %s53
      %p64 = scmp.eq.s32.totalorder %s23, 0
      %p65 = por %p63, %p64
      %p66 = scmp.ne.s32.totalorder %s52, %s53
      %p67 = scmp.eq.s32.totalorder %s24, 2
      %p68 = por %p66, %p67
      %p70 = scmp.ne.s32.totalorder %s53, %s69
      %p71 = scmp.eq.s32.totalorder %s24, 0
      %p72 = por %p70, %p71
      %s74 = sadd.s32 %s73, 1
      %p77 = scmp.eq.s32.totalorder %s18, 2
      %p78 = scmp.ne.s32.totalorder %s73, %s75
      %p79 = scmp.eq.s32.totalorder %s18, 0
      %p80 = por %p78, %p79
      %p81 = scmp.ne.s32.totalorder %s73, %s75
      %p82 = scmp.eq.s32.totalorder %s23, 2
      %p83 = por %p81, %p82
      %p84 = scmp.ne.s32.totalorder %s75, %s76
      %p85 = scmp.eq.s32.totalorder %s23, 0
      %p86 = por %p84, %p85
      %p87 = scmp.ne.s32.totalorder %s75, %s76
      %p88 = scmp.eq.s32.totalorder %s24, 2
      %p89 = por %p87, %p88
      %p91 = scmp.ne.s32.totalorder %s76, %s90
      %p92 = scmp.eq.s32.totalorder %s24, 0
      %p93 = por %p91, %p92
      %s94 = ssub.s32 %s18, %s25
      %p95 = scmp.eq.s32.totalorder %s94, 0
      %s97 = sadd.s32 %s96, 1
      %s98 = scalar_select %p95, %s96, %s97
      %p101 = pneg %p95
      %p102 = scmp.eq.s32.totalorder %s18, 2
      %p103 = por %p101, %p102
      %p104 = scmp.ne.s32.totalorder %s96, %s99
      %p105 = scmp.eq.s32.totalorder %s18, 0
      %p106 = por %p104, %p105
      %p107 = scmp.ne.s32.totalorder %s96, %s99
      %p108 = scmp.eq.s32.totalorder %s23, 2
      %p109 = por %p107, %p108
      %p110 = scmp.ne.s32.totalorder %s99, %s100
      %p111 = scmp.eq.s32.totalorder %s23, 0
      %p112 = por %p110, %p111
      %p113 = scmp.ne.s32.totalorder %s99, %s100
      %p114 = scmp.eq.s32.totalorder %s24, 2
      %p115 = por %p113, %p114
      %p117 = scmp.ne.s32.totalorder %s100, %s116
      %p118 = scmp.eq.s32.totalorder %s24, 0
      %p119 = por %p117, %p118
      %s121 = sadd.s32 %s120, 1
      %p124 = scmp.eq.s32.totalorder %s18, 2
      %p125 = scmp.ne.s32.totalorder %s120, %s122
      %p126 = scmp.eq.s32.totalorder %s18, 0
      %p127 = por %p125, %p126
      %p128 = scmp.ne.s32.totalorder %s120, %s122
      %p129 = scmp.eq.s32.totalorder %s23, 2
      %p130 = por %p128, %p129
      %p131 = scmp.ne.s32.totalorder %s122, %s123
      %p132 = scmp.eq.s32.totalorder %s23, 0
      %p133 = por %p131, %p132
      %p134 = scmp.ne.s32.totalorder %s122, %s123
      %p135 = scmp.eq.s32.totalorder %s24, 2
      %p136 = por %p134, %p135
      %p138 = scmp.ne.s32.totalorder %s123, %s137
      %p139 = scmp.eq.s32.totalorder %s24, 0
      %p140 = por %p138, %p139
      %p141 = scmp.le.s32.totalorder 1, %s18
      %p142 = scmp.lt.s32.totalorder %s18, 4
      %p143 = pnand %p141, %p142
      %p144 = pneg %p143
      // Predicated region
      $region9: #{tpu_custom_call.1} parent=5 // pred_check
        _
      $region10: #{tpu_custom_call.1} parent=5 // pred_check_branch
        %146 = sbr.rel (%p143) target = $region12
      $region11: #{tpu_custom_call.1} parent=5 // pred_region
        %s147 = ssub.s32 %s18, 1
        // Predicated region
        $region13: #{tpu_custom_call.1} parent=11 // pred_check
          %p148 = pneg %p39
        $region14: #{tpu_custom_call.1} parent=11 // pred_check_branch
          %150 = sbr.rel (%p148) target = $region16
        $region15: #{tpu_custom_call.1} parent=11 // pred_region
          _
        $region16: #{tpu_custom_call.1} parent=11 // pred_fallthru
          _
        // Predicated region
        $region17: #{tpu_custom_call.1} parent=11 // pred_check
          %p151 = pneg %p86
        $region18: #{tpu_custom_call.1} parent=11 // pred_check_branch
          %153 = sbr.rel (%p151) target = $region20
        $region19: #{tpu_custom_call.1} parent=11 // pred_region
          _
        $region20: #{tpu_custom_call.1} parent=11 // pred_fallthru
          _
      $region12: #{tpu_custom_call.1} parent=5 // pred_fallthru
        _
      %p154 = scmp.lt.s32.totalorder %s18, 3
      // Predicated region
      $region21: #{tpu_custom_call.1} parent=5 // pred_check
        %p155 = pneg %p154
      $region22: #{tpu_custom_call.1} parent=5 // pred_check_branch
        %157 = sbr.rel (%p155) target = $region24
      $region23: #{tpu_custom_call.1} parent=5 // pred_region
        // Predicated region
        $region25: #{tpu_custom_call.1} parent=23 // pred_check
          %p158 = pneg %p59
        $region26: #{tpu_custom_call.1} parent=23 // pred_check_branch
          %160 = sbr.rel (%p158) target = $region28
        $region27: #{tpu_custom_call.1} parent=23 // pred_region
          %s161 = sand.u32 %s49, 1
          %s162 = scalar_lea.sflag [#allocation6], %s161
          %s163 = sand.u32 %s49, 1
          %s164 = smul.addr %s163, 32
          %s165 = scalar_lea.vmem [#allocation5], %s164
          %s167 = ssub.s32 512, 512
          %168 = vsyncadd %s162, %s167
          %s169 = smul.addr %s18, 128
          %s170 = scalar_lea.hbm %s1, %s169
          %s171 = sshll.u32 %s165, 4
          %s172 = int_to_ptr.vmem [resolvable:$true] %s171
          %177 = dma.hbm_to_vmem [thread:$0]  %s170, 512, %s172, %s162, 384, 128, 8
        $region28: #{tpu_custom_call.1} parent=23 // pred_fallthru
          _
      $region24: #{tpu_custom_call.1} parent=5 // pred_fallthru
        _
      %p178 = scmp.le.s32.totalorder 1, %s18
      %p179 = scmp.lt.s32.totalorder %s18, 4
      %p180 = pnand %p178, %p179
      %p181 = pneg %p180
      // Predicated region
      $region29: #{tpu_custom_call.1} parent=5 // pred_check
        _
      $region30: #{tpu_custom_call.1} parent=5 // pred_check_branch
        %183 = sbr.rel (%p180) target = $region32
      $region31: #{tpu_custom_call.1} parent=5 // pred_region
        %s184 = ssub.s32 %s18, 1
        %s185 = sand.u32 %s52, 1
        %s186 = scalar_lea.sflag [#allocation6], %s185
        %s187 = sand.u32 %s52, 1
        %s188 = smul.addr %s187, 32
        %s189 = scalar_lea.vmem [#allocation5], %s188
        // Predicated region
        $region33: #{tpu_custom_call.1} parent=31 // pred_check
          %p190 = pneg %p65
        $region34: #{tpu_custom_call.1} parent=31 // pred_check_branch
          %192 = sbr.rel (%p190) target = $region36
        $region35: #{tpu_custom_call.1} parent=31 // pred_region
          %193 = dma.done %s186, 512
        $region36: #{tpu_custom_call.1} parent=31 // pred_fallthru
          _
        %p194 = pneg %p39
        %p195 = pneg %p36
        %s196 = sand.u32 %s52, 1
        %s197 = scalar_lea.sflag [#allocation6], %s196
        %s198 = sand.u32 %s52, 1
        %s199 = smul.addr %s198, 32
        %s200 = scalar_lea.vmem [#allocation5], %s199
        %p201 = pneg %p65
        %p202 = pneg %p62
        %p203 = pneg %p86
        %p204 = pneg %p83
        %p205 = pneg %p112
        %p206 = pneg %p109
        %s207 = sand.u32 %s99, 1
        %s208 = scalar_lea.sflag [#allocation7], %s207
        %s209 = sand.u32 %s99, 1
        %s210 = smul.addr %s209, 8
        %s211 = scalar_lea.vmem [#allocation8], %s210
        %p212 = pneg %p133
        %p213 = pneg %p130
        %p214 = scmp.eq.s32.totalorder %s23, 0
        // Predicated region
        $region37: #{tpu_custom_call.1} parent=31 // pred_check
          %p215 = pneg %p214
        $region38: #{tpu_custom_call.1} parent=31 // pred_check_branch
          %217 = sbr.rel (%p215) target = $region40
        $region39: #{tpu_custom_call.1} parent=31 // pred_region
          %v218 = vld [vmem:[%s0] sm:$0xff]
          %v219 = vmul.f32 %v218, %v218
          %vm220 = vcmask 261120
          %v221 = vsel %vm220, %v219, 0.0
          %222 = vadd.xlane.f32.xlu0 %v221
          %v223 = vpop.xlane.xlu0 %222
          %v224 = vrsqrt.pop %v223
          %v225 = vmul.f32 %v223, %v224
          %vm226 = vcmp.eq.f32.partialorder %v223, inf
          %v227 = vsel %vm226, %v223, %v225
          %vm228 = vcmp.eq.f32.partialorder %v223, 0.0
          %v229 = vand.u32 %v223, 2147483648
          %v230 = vsel %vm228, %v229, %v227
          %v231 = vrcp.pop %v230
          %v232 = vmul.f32 %v218, %v231
          %233 = vst.msk [vmem:[#allocation2] sm:$0xff] %vm220, %v232
          %vm234 = vcmask 7168
          %235 = vst.msk [vmem:[#allocation3] sm:$0xff] %vm234, 0.0
          %236 = vst.msk [vmem:[#allocation4] sm:$0xff] %vm234, 0.0
        $region40: #{tpu_custom_call.1} parent=31 // pred_fallthru
          _
        %v237 = vld [vmem:[#allocation2] sm:$0xff]
        %v238 = vld [vmem:[%s189] sm:$0xff]
        %v239 = vld [vmem:[%s189 + $0x8] sm:$0xff]
        %v240 = vld [vmem:[%s189 + $0x10] sm:$0xff]
        %v241 = vld [vmem:[%s189 + $0x18] sm:$0xff]
        %vm242 = vcmask 261120
        %v244 = vsel %vm242, %v237, 0
        %246 = vmatprep.subr.mxu0 0.0
        %247 = vmatpush1.msra.mxu0 %v238
        %248 = vmatprep.subr.mxu0 0.0
        %249 = vmatpush1.msra.mxu0 %v239
        %250 = vmatprep.subr.mxu0 0.0
        %251 = vmatpush1.msra.mxu0 %v240
        %252 = vmatprep.subr.mxu0 0.0
        %253 = vmatpush1.msra.mxu0 %v241
        %254 = vmatprep.subr.mxu0 0.0
        %255 = vmatpush1.msra.mxu0 0.0
        %256 = vmatprep.subr.mxu0 0.0
        %257 = vmatpush1.msra.mxu0 0.0
        %258 = vmatprep.subr.mxu0 0.0
        %259 = vmatpush1.msra.mxu0 0.0
        %260 = vmatprep.subr.mxu0 0.0
        %261 = vmatpush1.msra.mxu0 0.0
        %262 = vmatprep.subr.mxu0 0.0
        %263 = vmatpush1.msra.mxu0 0.0
        %264 = vmatprep.subr.mxu0 0.0
        %265 = vmatpush1.msra.mxu0 0.0
        %266 = vmatprep.subr.mxu0 0.0
        %267 = vmatpush1.msra.mxu0 0.0
        %268 = vmatprep.subr.mxu0 0.0
        %269 = vmatpush1.msra.mxu0 0.0
        %270 = vmatprep.subr.mxu0 0.0
        %271 = vmatpush1.msra.mxu0 0.0
        %272 = vmatprep.subr.mxu0 0.0
        %273 = vmatpush1.msra.mxu0 0.0
        %274 = vmatprep.subr.mxu0 0.0
        %275 = vmatpush1.msra.mxu0 0.0
        %276 = vmatprep.subr.mxu0 0.0
        %277 = vmatpush1.msra.mxu0 0.0
        %278 = vmatprep.subr.mxu0 0.0
        %279 = vmatpush1.msra.mxu0 0.0
        %280 = vmatprep.subr.mxu0 0.0
        %281 = vmatpush1.msra.mxu0 0.0
        %282 = vmatprep.subr.mxu0 0.0
        %283 = vmatpush1.msra.mxu0 0.0
        %284 = vmatprep.subr.mxu0 0.0
        %285 = vmatpush1.msra.mxu0 0.0
        %286 = vmatprep.subr.mxu0 0.0
        %287 = vmatpush1.msra.mxu0 0.0
        %288 = vmatprep.subr.mxu0 0.0
        %289 = vmatpush1.msra.mxu0 0.0
        %290 = vmatprep.subr.mxu0 0.0
        %291 = vmatpush1.msra.mxu0 0.0
        %292 = vmatprep.subr.mxu0 0.0
        %293 = vmatpush1.msra.mxu0 0.0
        %294 = vmatprep.subr.mxu0 0.0
        %295 = vmatpush1.msra.mxu0 0.0
        %296 = vmatprep.subr.mxu0 0.0
        %297 = vmatpush1.msra.mxu0 0.0
        %298 = vmatprep.subr.mxu0 0.0
        %299 = vmatpush1.msra.mxu0 0.0
        %300 = vmatprep.subr.mxu0 0.0
        %301 = vmatpush1.msra.mxu0 0.0
        %302 = vmatprep.subr.mxu0 0.0
        %303 = vmatpush1.msra.mxu0 0.0
        %304 = vmatprep.subr.mxu0 0.0
        %305 = vmatpush1.msra.mxu0 0.0
        %306 = vmatprep.subr.mxu0 0.0
        %307 = vmatpush1.msra.mxu0 0.0
        %308 = vmatprep.subr.mxu0 0.0
        %309 = vmatpush1.msra.mxu0 0.0
        %310 = vmatprep.mubr.f32.mxu0 0.0
        %311 = vmatmul.mubr.f32.gmra.mrb[0].mxu0 %v244
        %v312 = vpop.f32.mrb[0].mxu0
        %v313 = vadd.f32 0.0, %v312
        %v314 = vpop.f32.mrb[0].mxu0
        %315 = vdwg.mxu0
        %316 = vst [vmem:[%s211] sm:$0xff] %v313
        %v317 = vlaneseq
        %v318 = vand.u32 %v317, 127
        %s319 = smul.u32 %s23, 128
        %v320 = vstv %s319
        %v321 = vadd.s32 %v318, %v320
        %vm322 = vcmp.lt.s32.totalorder %v321, 384
        %v323 = vmul.f32 %v313, 14.285714
        %v324 = vmul.f32 %v323, 1.442695
        %v325 = vpow.pop %v324
        %v326 = vsel %vm322, %v325, 0.0
        %v327 = vld [vmem:[%s2] sm:$0xff]
        %328 = vset.pattern.permute.xlu0 0
        %329 = vperm.xlu0 %328, %v327
        %v330 = vpop.permute.xlu0 %329
        %vm331 = vcmp.eq.s32.totalorder %v321, %v330
        %v332 = vld [vmem:[#allocation3] sm:$0xff]
        %333 = vadd.xlane.f32.xlu0 %v326
        %v334 = vpop.xlane.xlu0 %333
        %v335 = vadd.f32 %v332, %v334
        %vm336 = vcmask 7168
        %337 = vst.msk [vmem:[#allocation3] sm:$0xff] %vm336, %v335
        %v338 = vld [vmem:[#allocation4] sm:$0xff]
        %v339 = vsel %vm331, %v326, 0.0
        %340 = vadd.xlane.f32.xlu0 %v339
        %v341 = vpop.xlane.xlu0 %340
        %v342 = vadd.f32 %v338, %v341
        %343 = vst.msk [vmem:[#allocation4] sm:$0xff] %vm336, %v342
        %p344 = scmp.eq.s32.totalorder %s23, 2
        // Predicated region
        $region41: #{tpu_custom_call.1} parent=31 // pred_check
          %p345 = pneg %p344
        $region42: #{tpu_custom_call.1} parent=31 // pred_check_branch
          %347 = sbr.rel (%p345) target = $region44
        $region43: #{tpu_custom_call.1} parent=31 // pred_region
          %v348 = vld [vmem:[#allocation4] sm:$0xff]
          %v349 = vld [vmem:[#allocation3] sm:$0xff]
          %v350 = vsub.f32 %v349, %v348
          %v351 = vrcp.pop %v350
          %v352 = vmul.f32 %v348, %v351
          %v353 = vadd.f32 %v352, 1e-07
          %v354 = vlog2.pop %v353
          %v355 = vmul.f32 %v354, 0.6931472
          %v356 = vsel %vm336, %v355, 0.0
          %v357 = vrot.slane %v356, 4
          %v358 = vadd.f32 %v356, %v357
          %v359 = vrot.slane %v358, 2
          %v360 = vadd.f32 %v358, %v359
          %v361 = vrot.slane %v360, 1
          %v362 = vadd.f32 %v360, %v361
          %v363 = vsub.f32 0.0, %v362
          %v364 = vmul.f32 %v363, 0.125
          %vm365 = vcmask 0
          %366 = vst.msk [vmem:[#allocation9] sm:$0x1] %vm365, %v364
        $region44: #{tpu_custom_call.1} parent=31 // pred_fallthru
          _
        %s367 = sand.u32 %s99, 1
        %s368 = scalar_lea.sflag [#allocation7], %s367
        %s369 = sand.u32 %s99, 1
        %s370 = smul.addr %s369, 8
        %s371 = scalar_lea.vmem [#allocation8], %s370
        // Predicated region
        $region45: #{tpu_custom_call.1} parent=31 // pred_check
          %p372 = pneg %p109
        $region46: #{tpu_custom_call.1} parent=31 // pred_check_branch
          %374 = sbr.rel (%p372) target = $region48
        $region47: #{tpu_custom_call.1} parent=31 // pred_region
          %s376 = ssub.s32 128, 128
          %377 = vsyncadd %s368, %s376
          %s378 = smul.addr %s23, 128
          %s379 = scalar_lea.hbm %s3, %s378
          %s381 = sshll.u32 %s371, 4
          %s382 = int_to_ptr.vmem [resolvable:$true] %s381
          %384 = dma.vmem_to_hbm [thread:$0]  %s382, 128, %s379, %s368
        $region48: #{tpu_custom_call.1} parent=31 // pred_fallthru
          _
        // Predicated region
        $region49: #{tpu_custom_call.1} parent=31 // pred_check
          %p385 = pneg %p130
        $region50: #{tpu_custom_call.1} parent=31 // pred_check_branch
          %387 = sbr.rel (%p385) target = $region52
        $region51: #{tpu_custom_call.1} parent=31 // pred_region
          %s389 = ssub.s32 16, 16
          %390 = vsyncadd [#allocation10], %s389
          %s392 = sshll.u32 [#allocation9], 4
          %s393 = int_to_ptr.vmem [resolvable:$true] %s392
          %395 = dma.vmem_to_hbm [thread:$0]  %s393, 16, %s4, [#allocation10]
        $region52: #{tpu_custom_call.1} parent=31 // pred_fallthru
          _
        // Predicated region
        $region53: #{tpu_custom_call.1} parent=31 // pred_check
          %p396 = pneg %p130
        $region54: #{tpu_custom_call.1} parent=31 // pred_check_branch
          %398 = sbr.rel (%p396) target = $region56
        $region55: #{tpu_custom_call.1} parent=31 // pred_region
          %399 = dma.done [#allocation10], 16
        $region56: #{tpu_custom_call.1} parent=31 // pred_fallthru
          _
      $region32: #{tpu_custom_call.1} parent=5 // pred_fallthru
        _
      %p400 = scmp.le.s32.totalorder 2, %s18
      // Predicated region
      $region57: #{tpu_custom_call.1} parent=5 // pred_check
        %p401 = pneg %p400
      $region58: #{tpu_custom_call.1} parent=5 // pred_check_branch
        %403 = sbr.rel (%p401) target = $region60
      $region59: #{tpu_custom_call.1} parent=5 // pred_region
        %s404 = ssub.s32 %s18, 2
        // Predicated region
        $region61: #{tpu_custom_call.1} parent=59 // pred_check
          %p405 = pneg %p115
        $region62: #{tpu_custom_call.1} parent=59 // pred_check_branch
          %407 = sbr.rel (%p405) target = $region64
        $region63: #{tpu_custom_call.1} parent=59 // pred_region
          %s408 = sand.u32 %s100, 1
          %s409 = scalar_lea.sflag [#allocation7], %s408
          %s410 = sand.u32 %s100, 1
          %s411 = smul.addr %s410, 8
          %s412 = scalar_lea.vmem [#allocation8], %s411
          %413 = dma.done %s409, 128
        $region64: #{tpu_custom_call.1} parent=59 // pred_fallthru
          _
      $region60: #{tpu_custom_call.1} parent=5 // pred_fallthru
        _
    $region6: #{tpu_custom_call.1} parent=1 // loop_footer
      %s22 = sadd.s32 1, %s18
    $region7: #{tpu_custom_call.1} parent=1 // loop_footer_branch
      %17 = sbr.rel target = $region3
    $region8: #{tpu_custom_call.1} parent=1 // loop_exit
      _
    %414 = vsyncpa [#allocation6], 1
    %s415 = scalar_lea.sflag [#allocation6], 1
    %416 = vsyncpa %s415, 1
    %417 = vsyncpa [#allocation7], 1
    %s418 = scalar_lea.sflag [#allocation7], 1
    %419 = vsyncpa %s418, 1
    %420 = vsyncpa [#allocation10], 1

</llo_original>
